<compile_context>
chip_gen: v6e
topology: v6e:2x2x1
jax: 0.10.0
libtpu: 0.0.40
codegen_flags: <defaults>
</compile_context>

<pallas_src>
import functools

import jax
import jax.numpy as jnp
from jax.experimental import pallas as pl
from jax.experimental.pallas import tpu as pltpu


def _linear_hardswish_kernel(x_ref, w_ref, b_ref, o_ref, *, compute_dtype):
    # Single K block: fused matmul + bias + hardswish gate, written straight
    # into the output tile (no scratch accumulator, no pl.when phases).
    y = jnp.dot(
        x_ref[...].astype(compute_dtype),
        w_ref[...].astype(compute_dtype),
        preferred_element_type=jnp.float32,
    ) + b_ref[...]
    gate = jnp.maximum(jnp.minimum(y + 3.0, 6.0), 0.0)
    o_ref[...] = (y * gate * (1.0 / 6.0)).astype(o_ref.dtype)


def linear_hardswish(x, w, b, *, tm=512, compute_dtype=jnp.float32):
    """x: (M, IN), w: (IN, OUT), b: (1, OUT) -> (M, OUT) float32.

    IN/OUT are small (10), so K and N are each a single full-dim block; only
    the M (batch) axis is gridded. No padding or post-slicing is performed.
    """
    M, IN = x.shape
    OUT = w.shape[1]

    # One full-dim block when the batch is small (e.g. the 1x10 test input);
    # otherwise tile M with an 8-aligned block and let Pallas mask the
    # trailing partial block.
    tm_eff = M if M <= tm else tm
    grid = (pl.cdiv(M, tm_eff),)

    kernel = functools.partial(_linear_hardswish_kernel, compute_dtype=compute_dtype)

    return pl.pallas_call(
        kernel,
        out_shape=jax.ShapeDtypeStruct((M, OUT), jnp.float32),
        grid=grid,
        in_specs=[
            pl.BlockSpec((tm_eff, IN), lambda i: (i, 0)),
            pl.BlockSpec((IN, OUT), lambda i: (0, 0)),
            pl.BlockSpec((1, OUT), lambda i: (0, 0)),
        ],
        out_specs=pl.BlockSpec((tm_eff, OUT), lambda i: (i, 0)),
        compiler_params=pltpu.CompilerParams(
            dimension_semantics=("parallel",),
        ),
    )(x, w, b)


def reference(x, w, b):
    y = x @ w + b
    gate = jnp.clip(y + 3.0, 0.0, 6.0)
    return y * gate / 6.0


if __name__ == "__main__":
    key = jax.random.PRNGKey(0)
    kx, kw, kb = jax.random.split(key, 3)

    B, IN, OUT = 1, 10, 10
    x = jax.random.normal(kx, (B, IN), dtype=jnp.float32)

    # Deterministic init mimicking nn.Linear(10, 10): U(-1/sqrt(in), 1/sqrt(in))
    bound = 1.0 / (IN ** 0.5)
    w_t = jax.random.uniform(kw, (OUT, IN), minval=-bound, maxval=bound,
                             dtype=jnp.float32)       # PyTorch weight (out, in)
    w = w_t.T                                         # stored (in, out): x @ w == x @ weight.T
    b = jax.random.uniform(kb, (1, OUT), minval=-bound, maxval=bound,
                           dtype=jnp.float32)

    out = linear_hardswish(x, w, b)
    jax.block_until_ready(out)

    ref = reference(x, w, b)
    assert out.shape == (B, OUT)
    assert jnp.allclose(out, ref, atol=1e-5, rtol=1e-5), (out, ref)
    print("KERNEL_OK")
</pallas_src>

<mosaic_0001>
module attributes {stable_mosaic.version = 11 : i64} {
  func.func @_linear_hardswish_kernel(%arg0: i32, %arg1: memref<1x10xf32, #tpu.memory_space<vmem>>, %arg2: memref<10x10xf32, #tpu.memory_space<vmem>>, %arg3: memref<1x10xf32, #tpu.memory_space<vmem>>, %arg4: memref<1x10xf32, #tpu.memory_space<vmem>>) attributes {dimension_semantics = [#tpu.dimension_semantics<parallel>], iteration_bounds = array<i64: 1>, scalar_prefetch = 0 : i64, scratch_operands = 0 : i64, tpu.core_type = #tpu.core_type<tc>, window_params = [{transform_indices = @transform_0, window_bounds = array<i64: 1, 10>}, {pipeline_mode = #tpu.pipeline_mode<synchronous>, transform_indices = @transform_1, window_bounds = array<i64: 10, 10>}, {pipeline_mode = #tpu.pipeline_mode<synchronous>, transform_indices = @transform_2, window_bounds = array<i64: 1, 10>}, {transform_indices = @transform_3, window_bounds = array<i64: 1, 10>}]} {
    %c0 = arith.constant 0 : index
    %c0_0 = arith.constant 0 : index
    %0 = vector.load %arg1[%c0, %c0_0] : memref<1x10xf32, #tpu.memory_space<vmem>>, vector<1x10xf32>
    %c0_1 = arith.constant 0 : index
    %c0_2 = arith.constant 0 : index
    %1 = vector.load %arg2[%c0_1, %c0_2] : memref<10x10xf32, #tpu.memory_space<vmem>>, vector<10x10xf32>
    %cst = arith.constant dense<0.000000e+00> : vector<1x10xf32>
    %2 = tpu.matmul %0, %1, %cst {dimension_numbers = #tpu.dot_dimension_numbers<[1], [0], [0], [1], [0, 0, 1, 1], [], []>} : vector<1x10xf32>, vector<10x10xf32>, vector<1x10xf32> -> vector<1x10xf32>
    %c0_3 = arith.constant 0 : index
    %c0_4 = arith.constant 0 : index
    %3 = vector.load %arg3[%c0_3, %c0_4] : memref<1x10xf32, #tpu.memory_space<vmem>>, vector<1x10xf32>
    %4 = arith.addf %2, %3 : vector<1x10xf32>
    %cst_5 = arith.constant 3.000000e+00 : f32
    %5 = vector.broadcast %cst_5 : f32 to vector<1x10xf32>
    %6 = arith.addf %4, %5 : vector<1x10xf32>
    %cst_6 = arith.constant 6.000000e+00 : f32
    %7 = vector.broadcast %cst_6 : f32 to vector<1x10xf32>
    %8 = arith.minimumf %6, %7 : vector<1x10xf32>
    %cst_7 = arith.constant 0.000000e+00 : f32
    %9 = vector.broadcast %cst_7 : f32 to vector<1x10xf32>
    %10 = arith.maximumf %8, %9 : vector<1x10xf32>
    %11 = arith.mulf %4, %10 : vector<1x10xf32>
    %cst_8 = arith.constant 0.166666672 : f32
    %12 = vector.broadcast %cst_8 : f32 to vector<1x10xf32>
    %13 = arith.mulf %11, %12 : vector<1x10xf32>
    %c0_9 = arith.constant 0 : index
    %c0_10 = arith.constant 0 : index
    %14 = vector.load %arg4[%c0_9, %c0_10] : memref<1x10xf32, #tpu.memory_space<vmem>>, vector<1x10xf32>
    tpu.vector_store %arg4[%c0_9, %c0_10], %13 {strides = array<i32>} : memref<1x10xf32, #tpu.memory_space<vmem>>, vector<1x10xf32>,
    return
  }
  func.func @transform_0(%arg0: i32) -> (i32, i32) {
    %c0_i32 = arith.constant 0 : i32
    %c0_i32_0 = arith.constant 0 : i32
    return %arg0, %c0_i32 : i32, i32
  }
  func.func @transform_1(%arg0: i32) -> (i32, i32) {
    %c0_i32 = arith.constant 0 : i32
    %c0_i32_0 = arith.constant 0 : i32
    %c0_i32_1 = arith.constant 0 : i32
    return %c0_i32, %c0_i32_0 : i32, i32
  }
  func.func @transform_2(%arg0: i32) -> (i32, i32) {
    %c0_i32 = arith.constant 0 : i32
    %c0_i32_0 = arith.constant 0 : i32
    %c0_i32_1 = arith.constant 0 : i32
    return %c0_i32, %c0_i32_0 : i32, i32
  }
  func.func @transform_3(%arg0: i32) -> (i32, i32) {
    %c0_i32 = arith.constant 0 : i32
    %c0_i32_0 = arith.constant 0 : i32
    return %arg0, %c0_i32 : i32, i32
  }
}

</mosaic_0001>

<llo_original>
// kernel: tpu_custom_call.1
$region0: #{tpu_custom_call.1}
  #allocation0 [shape = 'u32[]', space=smem, size = 0x4, offset = 0x4, fixed_abs, tag = 'smem constant byte address 0x4 - core index']
  #allocation1 [shape = 'u32[144,128]{1,0:T(1,128)}', space=vmem, size = 0x12000, scoped, tag = 'internal scratch']
  %s0 = inlined_call_operand.hbm [shape: f32[1,10], index: 0, kind: input, shape index: {}]
  %s1 = inlined_call_operand.hbm [shape: f32[10,10], index: 1, kind: input, shape index: {}]
  %s2 = inlined_call_operand.vmem [shape: f32[1,10], index: 2, kind: input, shape index: {}]
  %s3 = inlined_call_operand.hbm [shape: f32[1,10], index: 3, kind: output, shape index: {}]
  %s4 = sld [smem:[#allocation0]]
  $region30: #{tpu_custom_call.1} parent=0
    _
  %s6 = ssub.s32 1, %s4
  %s7 = scalar_select 0, %s6, %s4
  $region1: #{tpu_custom_call.1} parent=0
    #allocation2 [shape = 'u8[512]{0}', space=vmem, size = 0x400, scoped, tag = 'input window, operand 0, single buffered']
    #allocation3 [shape = 's32[1]{0}', space=sflag, size = 0x4, scoped, tag = 'scoped memory for tpu_custom_call.1']
    #allocation4 [shape = 's32[1]{0}', space=sflag, size = 0x4, scoped, tag = 'scoped memory for tpu_custom_call.1']
    #allocation5 [shape = 'u8[8192]{0}', space=vmem, size = 0x2000, scoped, tag = 'input window, operand 1, single buffered']
    #allocation6 [shape = 's32[1]{0}', space=sflag, size = 0x4, scoped, tag = 'scoped memory for tpu_custom_call.1']
    #allocation7 [shape = 'u8[512]{0}', space=vmem, size = 0x400, scoped, tag = 'output window, operand 0, single buffered']
    %8 = vsyncpa [#allocation3], 0
    %9 = vsyncpa [#allocation6], 0
    %10 = vsyncpa [#allocation4], 0
    // Predicated region
    $region2: #{tpu_custom_call.1} parent=1 // pred_check
      _
    $region3: #{tpu_custom_call.1} parent=1 // pred_check_branch
      %12 = sbr.rel (0) target = $region5
    $region4: #{tpu_custom_call.1} parent=1 // pred_region
      %s14 = ssub.s32 16, 16
      %15 = vsyncadd [#allocation3], %s14
      %s17 = sshll.u32 [#allocation2], 4
      %s18 = int_to_ptr.vmem [resolvable:$true] %s17
      %20 = dma.hbm_to_vmem [thread:$0]  %s0, 16, %s18, [#allocation3]
    $region5: #{tpu_custom_call.1} parent=1 // pred_fallthru
      _
    // Predicated region
    $region6: #{tpu_custom_call.1} parent=1 // pred_check
      _
    $region7: #{tpu_custom_call.1} parent=1 // pred_check_branch
      %22 = sbr.rel (0) target = $region9
    $region8: #{tpu_custom_call.1} parent=1 // pred_region
      %s24 = ssub.s32 256, 256
      %25 = vsyncadd [#allocation6], %s24
      %s26 = sshll.u32 [#allocation5], 4
      %s27 = int_to_ptr.vmem [resolvable:$true] %s26
      %32 = dma.hbm_to_vmem [thread:$0]  %s1, 256, %s27, [#allocation6], 128, 128, 8
    $region9: #{tpu_custom_call.1} parent=1 // pred_fallthru
      _
    // Predicated region
    $region10: #{tpu_custom_call.1} parent=1 // pred_check
      _
    $region11: #{tpu_custom_call.1} parent=1 // pred_check_branch
      %34 = sbr.rel (0) target = $region13
    $region12: #{tpu_custom_call.1} parent=1 // pred_region
      _
    $region13: #{tpu_custom_call.1} parent=1 // pred_fallthru
      _
    // Predicated region
    $region14: #{tpu_custom_call.1} parent=1 // pred_check
      _
    $region15: #{tpu_custom_call.1} parent=1 // pred_check_branch
      %36 = sbr.rel (0) target = $region17
    $region16: #{tpu_custom_call.1} parent=1 // pred_region
      %37 = dma.done [#allocation3], 16
    $region17: #{tpu_custom_call.1} parent=1 // pred_fallthru
      _
    // Predicated region
    $region18: #{tpu_custom_call.1} parent=1 // pred_check
      _
    $region19: #{tpu_custom_call.1} parent=1 // pred_check_branch
      %39 = sbr.rel (0) target = $region21
    $region20: #{tpu_custom_call.1} parent=1 // pred_region
      %40 = dma.done [#allocation6], 256
    $region21: #{tpu_custom_call.1} parent=1 // pred_fallthru
      _
    %v41 = vld [vmem:[#allocation2] sm:$0x1]
    %v42 = vld [vmem:[#allocation5] sm:$0xff]
    %v43 = vld [vmem:[#allocation5 + $0x8] sm:$0x3]
    %v44 = vld [vmem:[%s2] sm:$0x1]
    %vm45 = vcmask 80896
    %v47 = vsel %vm45, %v41, 0
    %vm49 = vcmask 1041408
    %v51 = vsel %vm49, %v43, 0
    %53 = vmatprep.subr.mxu0 0.0
    %54 = vmatpush1.msra.mxu0 0.0
    %55 = vmatprep.subr.mxu0 0.0
    %56 = vmatpush1.msra.mxu0 0.0
    %57 = vmatprep.subr.mxu0 0.0
    %58 = vmatpush1.msra.mxu0 0.0
    %59 = vmatprep.subr.mxu0 0.0
    %60 = vmatpush1.msra.mxu0 0.0
    %61 = vmatprep.subr.mxu0 0.0
    %62 = vmatpush1.msra.mxu0 0.0
    %63 = vmatprep.subr.mxu0 0.0
    %64 = vmatpush1.msra.mxu0 0.0
    %65 = vmatprep.subr.mxu0 0.0
    %66 = vmatpush1.msra.mxu0 0.0
    %67 = vmatprep.subr.mxu0 0.0
    %68 = vmatpush1.msra.mxu0 0.0
    %69 = vmatprep.subr.mxu0 0.0
    %70 = vmatpush1.msra.mxu0 0.0
    %71 = vmatprep.subr.mxu0 0.0
    %72 = vmatpush1.msra.mxu0 0.0
    %73 = vmatprep.subr.mxu0 0.0
    %74 = vmatpush1.msra.mxu0 0.0
    %75 = vmatprep.subr.mxu0 0.0
    %76 = vmatpush1.msra.mxu0 0.0
    %77 = vmatprep.subr.mxu0 0.0
    %78 = vmatpush1.msra.mxu0 0.0
    %79 = vmatprep.subr.mxu0 0.0
    %80 = vmatpush1.msra.mxu0 0.0
    %81 = vmatprep.subr.mxu0 0.0
    %82 = vmatpush1.msra.mxu0 %v51
    %83 = vmatprep.subr.mxu0 0.0
    %84 = vmatpush1.msra.mxu0 %v42
    %85 = vmatprep.subr.mxu0 0.0
    %86 = vmatpush2.msra.mxu0 0.0
    %87 = vmatprep.subr.mxu0 0.0
    %88 = vmatpush2.msra.mxu0 0.0
    %89 = vmatprep.subr.mxu0 0.0
    %90 = vmatpush2.msra.mxu0 0.0
    %91 = vmatprep.subr.mxu0 0.0
    %92 = vmatpush2.msra.mxu0 0.0
    %93 = vmatprep.subr.mxu0 0.0
    %94 = vmatpush2.msra.mxu0 0.0
    %95 = vmatprep.subr.mxu0 0.0
    %96 = vmatpush2.msra.mxu0 0.0
    %97 = vmatprep.subr.mxu0 0.0
    %98 = vmatpush2.msra.mxu0 0.0
    %99 = vmatprep.subr.mxu0 0.0
    %100 = vmatpush2.msra.mxu0 0.0
    %101 = vmatprep.subr.mxu0 0.0
    %102 = vmatpush2.msra.mxu0 0.0
    %103 = vmatprep.subr.mxu0 0.0
    %104 = vmatpush2.msra.mxu0 0.0
    %105 = vmatprep.subr.mxu0 0.0
    %106 = vmatpush2.msra.mxu0 0.0
    %107 = vmatprep.subr.mxu0 0.0
    %108 = vmatpush2.msra.mxu0 0.0
    %109 = vmatprep.subr.mxu0 0.0
    %110 = vmatpush2.msra.mxu0 0.0
    %111 = vmatprep.subr.mxu0 0.0
    %112 = vmatpush2.msra.mxu0 0.0
    %113 = vmatprep.subr.mxu0 0.0
    %114 = vmatpush2.msra.mxu0 0.0
    %115 = vmatprep.subr.mxu0 0.0
    %116 = vmatpush2.msra.mxu0 0.0
    %117 = vmatprep.mubr.f32.mxu0 0.0
    %118 = vmatmul.mubr.f32.gmra.mxu0 %v47
    %v119 = vpop.f32.mrf.mxu0
    %v120 = vadd.f32 %v44, %v119
    %v121 = vpop.f32.mrf.mxu0
    %122 = vdwg.mxu0
    %v123 = vadd.f32 %v120, 3.0
    %v124 = vmin.f32 %v123, 6.0
    %v125 = vmax.f32 %v124, 0.0
    %v126 = vmul.f32 %v120, %v125
    %v127 = vmul.f32 %v126, 0.16666667
    %vm128 = vcmask 73728
    %129 = vst.msk [vmem:[#allocation7] sm:$0x1] %vm128, %v127
    // Predicated region
    $region22: #{tpu_custom_call.1} parent=1 // pred_check
      _
    $region23: #{tpu_custom_call.1} parent=1 // pred_check_branch
      %131 = sbr.rel (0) target = $region25
    $region24: #{tpu_custom_call.1} parent=1 // pred_region
      %s133 = ssub.s32 16, 16
      %134 = vsyncadd [#allocation4], %s133
      %s136 = sshll.u32 [#allocation7], 4
      %s137 = int_to_ptr.vmem [resolvable:$true] %s136
      %139 = dma.vmem_to_hbm [thread:$0]  %s137, 16, %s3, [#allocation4]
    $region25: #{tpu_custom_call.1} parent=1 // pred_fallthru
      _
    // Predicated region
    $region26: #{tpu_custom_call.1} parent=1 // pred_check
      _
    $region27: #{tpu_custom_call.1} parent=1 // pred_check_branch
      %141 = sbr.rel (0) target = $region29
    $region28: #{tpu_custom_call.1} parent=1 // pred_region
      %142 = dma.done [#allocation4], 16
    $region29: #{tpu_custom_call.1} parent=1 // pred_fallthru
      _
    %143 = vsyncpa [#allocation3], 1
    %144 = vsyncpa [#allocation6], 1
    %145 = vsyncpa [#allocation4], 1

</llo_original>
